<compile_context>
chip_gen: v7x
topology: tpu7x:2x2x1
jax: 0.10.0
libtpu: 0.0.40
codegen_flags: <defaults>
</compile_context>

<pallas_src>
import jax
import jax.numpy as jnp
from jax.experimental import pallas as pl
from jax.experimental.pallas import tpu as pltpu

HIDDEN = 256


def _round_up(x, m):
    return (x + m - 1) // m * m


def _double_q_kernel(xs_ref, xr_ref,
                     w0s_ref, w0r_ref, b0_ref,
                     w1a_ref, b1a_ref, w1b_ref, b1b_ref,
                     w2_ref, b2_ref,
                     out_ref):
    H = w1a_ref.shape[0]                       # 256
    num_out = out_ref.shape[-1] // 2
    cdt = w0s_ref.dtype                        # MXU operand dtype (f32 or bf16)
    f32 = jnp.float32

    xs = xs_ref[...].astype(cdt)
    xr = xr_ref[...].astype(cdt)

    # Layer 0, both critics fused along the output axis ([:, :H]=q1, [:, H:]=q2),
    # with the state/action concat folded into two partial matmuls.
    h0 = (jnp.dot(xs, w0s_ref[...], preferred_element_type=f32)
          + jnp.dot(xr, w0r_ref[...], preferred_element_type=f32)
          + b0_ref[...])
    h0 = jnp.maximum(h0, 0.0)

    # Layer 1, per critic (256x256 == one MXU tile on v6e/v7x). Elementwise in f32.
    g1 = jnp.maximum(
        jnp.dot(h0[:, :H].astype(cdt), w1a_ref[...], preferred_element_type=f32)
        + b1a_ref[...], 0.0)
    g2 = jnp.maximum(
        jnp.dot(h0[:, H:].astype(cdt), w1b_ref[...], preferred_element_type=f32)
        + b1b_ref[...], 0.0)

    if num_out == 1:
        # N=1 head: VPU multiply + XLU lane reduction, skipping two tiny MXU matmuls.
        q1 = jnp.sum(g1 * w2_ref[0:1, :].astype(f32), axis=-1, keepdims=True)
        q2 = jnp.sum(g2 * w2_ref[1:2, :].astype(f32), axis=-1, keepdims=True)
        col = jax.lax.broadcasted_iota(jnp.int32, (out_ref.shape[0], 2), 1)
        out_ref[...] = jnp.where(col == 0, q1, q2) + b2_ref[...]
    else:
        # General head (num_out > 1): contract on the shared feature axis.
        dn = (((1,), (1,)), ((), ()))
        q1 = jax.lax.dot_general(g1.astype(cdt), w2_ref[:num_out, :], dn,
                                 preferred_element_type=f32)
        q2 = jax.lax.dot_general(g2.astype(cdt), w2_ref[num_out:, :], dn,
                                 preferred_element_type=f32)
        out_ref[...] = jnp.concatenate([q1, q2], axis=1) + b2_ref[...]


def pack_double_q_params(params, num_inputs, compute_dtype=jnp.float32):
    """Pack per-critic (w0,b0,w1,b1,w2,b2) params into fused kernel operands.

    Layer-0 weights of both critics are concatenated along the output axis and
    split at `num_inputs` rows (state rows vs. action[+lambdas] rows). Head
    weights are stored row-major ([2*num_out, 256]). Biases stay f32; weights
    may be cast to bf16 (recommended on v6e/v7x) - accumulation stays f32.
    """
    w0a, b0a, w1a, b1a, w2a, b2a = params["q1"]
    w0b, b0b, w1b, b1b, w2b, b2b = params["q2"]
    f32 = jnp.float32
    w0 = jnp.concatenate([w0a, w0b], axis=1)                     # [D, 2H]
    return dict(
        w0s=w0[:num_inputs].astype(compute_dtype),               # [S, 2H]
        w0r=w0[num_inputs:].astype(compute_dtype),               # [D-S, 2H]
        b0=jnp.concatenate([b0a, b0b], axis=1).astype(f32),      # [1, 2H]
        w1a=w1a.astype(compute_dtype), b1a=b1a.astype(f32),
        w1b=w1b.astype(compute_dtype), b1b=b1b.astype(f32),
        w2=jnp.concatenate([w2a.T, w2b.T], axis=0).astype(compute_dtype),  # [2*out, H]
        b2=jnp.concatenate([b2a, b2b], axis=1).astype(f32),      # [1, 2*out]
    )


def double_q_forward(state, action, packed, lambdas=None, *, tm_max=2048):
    """Returns (q1, q2), each [B, num_out]."""
    if lambdas is not None and lambdas.size > 0:
        # lambdas simply extend the non-state features (w0r was split the same way).
        rest = jnp.concatenate([action, lambdas], axis=1)
    else:
        rest = action
    state = state.astype(jnp.float32)
    rest = rest.astype(jnp.float32)

    B, S = state.shape
    R = rest.shape[1]
    two_out = packed["b2"].shape[1]
    num_out = two_out // 2
    H = packed["w1a"].shape[0]

    # Batch tiling: weights stay VMEM-resident (constant index_map), activations
    # stream tile-by-tile. tm is capped so activations + weights + double buffers
    # sit well under the 32 MiB scoped-VMEM default (safe on v7x's 64 MiB too).
    tm = min(tm_max, _round_up(B, 8))
    B_pad = _round_up(B, tm)
    if B_pad != B:
        state = jnp.pad(state, ((0, B_pad - B), (0, 0)))
        rest = jnp.pad(rest, ((0, B_pad - B), (0, 0)))

    def row_spec(cols):
        return pl.BlockSpec((tm, cols), lambda i: (i, 0))

    def full_spec(arr):
        return pl.BlockSpec(arr.shape, lambda i: (0, 0))

    weight_bytes = sum(int(v.size) * v.dtype.itemsize for v in packed.values())
    flops = 2 * B_pad * ((S + R) * 2 * H + 2 * H * H + 2 * H * num_out)
    bytes_accessed = weight_bytes + (B_pad * (S + R) + B_pad * two_out) * 4

    out = pl.pallas_call(
        _double_q_kernel,
        out_shape=jax.ShapeDtypeStruct((B_pad, two_out), jnp.float32),
        grid=(B_pad // tm,),
        in_specs=[row_spec(S), row_spec(R),
                  full_spec(packed["w0s"]), full_spec(packed["w0r"]),
                  full_spec(packed["b0"]),
                  full_spec(packed["w1a"]), full_spec(packed["b1a"]),
                  full_spec(packed["w1b"]), full_spec(packed["b1b"]),
                  full_spec(packed["w2"]), full_spec(packed["b2"])],
        out_specs=row_spec(two_out),
        compiler_params=pltpu.CompilerParams(
            dimension_semantics=("parallel",),      # megacore / v7x dual-TC sharding
            vmem_limit_bytes=32 * 1024 * 1024),
        cost_estimate=pl.CostEstimate(flops=flops, transcendentals=0,
                                      bytes_accessed=bytes_accessed),
    )(state, rest,
      packed["w0s"], packed["w0r"], packed["b0"],
      packed["w1a"], packed["b1a"], packed["w1b"], packed["b1b"],
      packed["w2"], packed["b2"])

    out = out[:B]
    return out[:, :num_out], out[:, num_out:]


# ----------------------------- init & reference -----------------------------

def _init_linear(key, fan_in, fan_out):
    # Deterministic stand-in for torch.nn.Linear default init (uniform +-1/sqrt(fan_in)).
    kw, kb = jax.random.split(key)
    bound = 1.0 / jnp.sqrt(float(fan_in))
    w = jax.random.uniform(kw, (fan_in, fan_out), jnp.float32, -bound, bound)
    b = jax.random.uniform(kb, (1, fan_out), jnp.float32, -bound, bound)
    return w, b


def init_double_q_params(key, num_inputs, num_actions, num_outputs=1):
    # n_hidden == 1 configuration: D -> 256 -> 256 -> num_outputs (per critic).
    D = num_inputs + num_actions
    keys = jax.random.split(key, 6)

    def make(ks):
        w0, b0 = _init_linear(ks[0], D, HIDDEN)
        w1, b1 = _init_linear(ks[1], HIDDEN, HIDDEN)
        w2, b2 = _init_linear(ks[2], HIDDEN, num_outputs)
        return (w0, b0, w1, b1, w2, b2)

    return {"q1": make(keys[:3]), "q2": make(keys[3:])}


def _ref_forward(state, action, params):
    xu = jnp.concatenate([state, action], axis=1)

    def mlp(p):
        w0, b0, w1, b1, w2, b2 = p
        h = jnp.maximum(xu @ w0 + b0, 0.0)
        h = jnp.maximum(h @ w1 + b1, 0.0)
        return h @ w2 + b2

    return mlp(params["q1"]), mlp(params["q2"])


def _cast_weights_bf16_roundtrip(p):
    w0, b0, w1, b1, w2, b2 = p
    c = lambda w: w.astype(jnp.bfloat16).astype(jnp.float32)
    return (c(w0), b0, c(w1), b1, c(w2), b2)


if __name__ == "__main__":
    key = jax.random.PRNGKey(0)
    k_state, k_action, k_params, k_big = jax.random.split(key, 4)

    B, NUM_INPUTS, NUM_ACTIONS = 8, 16, 8
    state = jax.random.normal(k_state, (B, NUM_INPUTS), jnp.float32)
    action = jax.random.normal(k_action, (B, NUM_ACTIONS), jnp.float32)

    params = init_double_q_params(k_params, NUM_INPUTS, NUM_ACTIONS, num_outputs=1)

    # --- f32 path (strict check) ---
    packed = pack_double_q_params(params, NUM_INPUTS)
    q1, q2 = double_q_forward(state, action, packed)
    jax.block_until_ready((q1, q2))
    r1, r2 = _ref_forward(state, action, params)
    assert q1.shape == (B, 1) and q2.shape == (B, 1)
    assert jnp.allclose(q1, r1, atol=1e-4, rtol=1e-4)
    assert jnp.allclose(q2, r2, atol=1e-4, rtol=1e-4)

    # --- multi-tile batch grid + padding path (tm=128 -> B_pad=384, grid=(3,)) ---
    B2 = 300
    ks1, ks2 = jax.random.split(k_big)
    state2 = jax.random.normal(ks1, (B2, NUM_INPUTS), jnp.float32)
    action2 = jax.random.normal(ks2, (B2, NUM_ACTIONS), jnp.float32)
    p1, p2 = double_q_forward(state2, action2, packed, tm_max=128)
    jax.block_until_ready((p1, p2))
    s1, s2 = _ref_forward(state2, action2, params)
    assert p1.shape == (B2, 1) and p2.shape == (B2, 1)
    assert jnp.allclose(p1, s1, atol=1e-4, rtol=1e-4)
    assert jnp.allclose(p2, s2, atol=1e-4, rtol=1e-4)

    # --- bf16-weight path (v6e/v7x: halves weight DMA, bf16 MXU rate; f32 accumulation) ---
    packed_bf = pack_double_q_params(params, NUM_INPUTS, compute_dtype=jnp.bfloat16)
    qb1, qb2 = double_q_forward(state, action, packed_bf)
    jax.block_until_ready((qb1, qb2))
    params_bf = {k: _cast_weights_bf16_roundtrip(v) for k, v in params.items()}
    rb1, rb2 = _ref_forward(state, action, params_bf)
    assert jnp.allclose(qb1, rb1, atol=5e-2, rtol=5e-2)
    assert jnp.allclose(qb2, rb2, atol=5e-2, rtol=5e-2)

    print("KERNEL_OK")
</pallas_src>

<mosaic_0001>
module attributes {stable_mosaic.version = 11 : i64} {
  func.func @_double_q_kernel(%arg0: i32, %arg1: memref<8x16xf32, #tpu.memory_space<vmem>>, %arg2: memref<8x8xf32, #tpu.memory_space<vmem>>, %arg3: memref<16x512xf32, #tpu.memory_space<vmem>>, %arg4: memref<8x512xf32, #tpu.memory_space<vmem>>, %arg5: memref<1x512xf32, #tpu.memory_space<vmem>>, %arg6: memref<256x256xf32, #tpu.memory_space<vmem>>, %arg7: memref<1x256xf32, #tpu.memory_space<vmem>>, %arg8: memref<256x256xf32, #tpu.memory_space<vmem>>, %arg9: memref<1x256xf32, #tpu.memory_space<vmem>>, %arg10: memref<2x256xf32, #tpu.memory_space<vmem>>, %arg11: memref<1x2xf32, #tpu.memory_space<vmem>>, %arg12: memref<8x2xf32, #tpu.memory_space<vmem>>) attributes {dimension_semantics = [#tpu.dimension_semantics<parallel>], iteration_bounds = array<i64: 1>, scalar_prefetch = 0 : i64, scratch_operands = 0 : i64, tpu.core_type = #tpu.core_type<tc>, window_params = [{transform_indices = @transform_0, window_bounds = array<i64: 8, 16>}, {transform_indices = @transform_1, window_bounds = array<i64: 8, 8>}, {pipeline_mode = #tpu.pipeline_mode<synchronous>, transform_indices = @transform_2, window_bounds = array<i64: 16, 512>}, {pipeline_mode = #tpu.pipeline_mode<synchronous>, transform_indices = @transform_3, window_bounds = array<i64: 8, 512>}, {pipeline_mode = #tpu.pipeline_mode<synchronous>, transform_indices = @transform_4, window_bounds = array<i64: 1, 512>}, {pipeline_mode = #tpu.pipeline_mode<synchronous>, transform_indices = @transform_5, window_bounds = array<i64: 256, 256>}, {pipeline_mode = #tpu.pipeline_mode<synchronous>, transform_indices = @transform_6, window_bounds = array<i64: 1, 256>}, {pipeline_mode = #tpu.pipeline_mode<synchronous>, transform_indices = @transform_7, window_bounds = array<i64: 256, 256>}, {pipeline_mode = #tpu.pipeline_mode<synchronous>, transform_indices = @transform_8, window_bounds = array<i64: 1, 256>}, {pipeline_mode = #tpu.pipeline_mode<synchronous>, transform_indices = @transform_9, window_bounds = array<i64: 2, 256>}, {pipeline_mode = #tpu.pipeline_mode<synchronous>, transform_indices = @transform_10, window_bounds = array<i64: 1, 2>}, {transform_indices = @transform_11, window_bounds = array<i64: 8, 2>}]} {
    %c0 = arith.constant 0 : index
    %c0_0 = arith.constant 0 : index
    %0 = vector.load %arg1[%c0, %c0_0] : memref<8x16xf32, #tpu.memory_space<vmem>>, vector<8x16xf32>
    %c0_1 = arith.constant 0 : index
    %c0_2 = arith.constant 0 : index
    %1 = vector.load %arg2[%c0_1, %c0_2] : memref<8x8xf32, #tpu.memory_space<vmem>>, vector<8x8xf32>
    %c0_3 = arith.constant 0 : index
    %c0_4 = arith.constant 0 : index
    %2 = vector.load %arg3[%c0_3, %c0_4] : memref<16x512xf32, #tpu.memory_space<vmem>>, vector<16x512xf32>
    %cst = arith.constant dense<0.000000e+00> : vector<8x512xf32>
    %3 = tpu.matmul %0, %2, %cst {dimension_numbers = #tpu.dot_dimension_numbers<[1], [0], [0], [1], [0, 0, 1, 1], [], []>} : vector<8x16xf32>, vector<16x512xf32>, vector<8x512xf32> -> vector<8x512xf32>
    %c0_5 = arith.constant 0 : index
    %c0_6 = arith.constant 0 : index
    %4 = vector.load %arg4[%c0_5, %c0_6] : memref<8x512xf32, #tpu.memory_space<vmem>>, vector<8x512xf32>
    %cst_7 = arith.constant dense<0.000000e+00> : vector<8x512xf32>
    %5 = tpu.matmul %1, %4, %cst_7 {dimension_numbers = #tpu.dot_dimension_numbers<[1], [0], [0], [1], [0, 0, 1, 1], [], []>} : vector<8x8xf32>, vector<8x512xf32>, vector<8x512xf32> -> vector<8x512xf32>
    %6 = arith.addf %3, %5 : vector<8x512xf32>
    %c0_8 = arith.constant 0 : index
    %c0_9 = arith.constant 0 : index
    %7 = vector.load %arg5[%c0_8, %c0_9] : memref<1x512xf32, #tpu.memory_space<vmem>>, vector<1x512xf32>
    %8 = vector.broadcast %7 : vector<1x512xf32> to vector<8x512xf32>
    %9 = arith.addf %6, %8 : vector<8x512xf32>
    %cst_10 = arith.constant 0.000000e+00 : f32
    %10 = vector.broadcast %cst_10 : f32 to vector<8x512xf32>
    %11 = arith.maximumf %9, %10 : vector<8x512xf32>
    %12 = vector.extract_strided_slice %11 {offsets = [0, 0], sizes = [8, 256], strides = [1, 1]} : vector<8x512xf32> to vector<8x256xf32>
    %c0_11 = arith.constant 0 : index
    %c0_12 = arith.constant 0 : index
    %13 = vector.load %arg6[%c0_11, %c0_12] : memref<256x256xf32, #tpu.memory_space<vmem>>, vector<256x256xf32>
    %cst_13 = arith.constant dense<0.000000e+00> : vector<8x256xf32>
    %14 = tpu.matmul %12, %13, %cst_13 {dimension_numbers = #tpu.dot_dimension_numbers<[1], [0], [0], [1], [0, 0, 1, 1], [], []>} : vector<8x256xf32>, vector<256x256xf32>, vector<8x256xf32> -> vector<8x256xf32>
    %c0_14 = arith.constant 0 : index
    %c0_15 = arith.constant 0 : index
    %15 = vector.load %arg7[%c0_14, %c0_15] : memref<1x256xf32, #tpu.memory_space<vmem>>, vector<1x256xf32>
    %16 = vector.broadcast %15 : vector<1x256xf32> to vector<8x256xf32>
    %17 = arith.addf %14, %16 : vector<8x256xf32>
    %cst_16 = arith.constant 0.000000e+00 : f32
    %18 = vector.broadcast %cst_16 : f32 to vector<8x256xf32>
    %19 = arith.maximumf %17, %18 : vector<8x256xf32>
    %20 = vector.extract_strided_slice %11 {offsets = [0, 256], sizes = [8, 256], strides = [1, 1]} : vector<8x512xf32> to vector<8x256xf32>
    %c0_17 = arith.constant 0 : index
    %c0_18 = arith.constant 0 : index
    %21 = vector.load %arg8[%c0_17, %c0_18] : memref<256x256xf32, #tpu.memory_space<vmem>>, vector<256x256xf32>
    %cst_19 = arith.constant dense<0.000000e+00> : vector<8x256xf32>
    %22 = tpu.matmul %20, %21, %cst_19 {dimension_numbers = #tpu.dot_dimension_numbers<[1], [0], [0], [1], [0, 0, 1, 1], [], []>} : vector<8x256xf32>, vector<256x256xf32>, vector<8x256xf32> -> vector<8x256xf32>
    %c0_20 = arith.constant 0 : index
    %c0_21 = arith.constant 0 : index
    %23 = vector.load %arg9[%c0_20, %c0_21] : memref<1x256xf32, #tpu.memory_space<vmem>>, vector<1x256xf32>
    %24 = vector.broadcast %23 : vector<1x256xf32> to vector<8x256xf32>
    %25 = arith.addf %22, %24 : vector<8x256xf32>
    %cst_22 = arith.constant 0.000000e+00 : f32
    %26 = vector.broadcast %cst_22 : f32 to vector<8x256xf32>
    %27 = arith.maximumf %25, %26 : vector<8x256xf32>
    %c0_23 = arith.constant 0 : index
    %c0_24 = arith.constant 0 : index
    %28 = vector.load %arg10[%c0_23, %c0_24] : memref<2x256xf32, #tpu.memory_space<vmem>>, vector<1x256xf32>
    %29 = vector.broadcast %28 : vector<1x256xf32> to vector<8x256xf32>
    %30 = arith.mulf %19, %29 : vector<8x256xf32>
    %cst_25 = arith.constant dense<0.000000e+00> : vector<8xf32>
    %31 = vector.multi_reduction <add>, %30, %cst_25 [1] : vector<8x256xf32> to vector<8xf32>
    %32 = vector.shape_cast %31 : vector<8xf32> to vector<8x1xf32>
    %c1 = arith.constant 1 : index
    %c0_26 = arith.constant 0 : index
    %33 = vector.load %arg10[%c1, %c0_26] : memref<2x256xf32, #tpu.memory_space<vmem>>, vector<1x256xf32>
    %34 = vector.broadcast %33 : vector<1x256xf32> to vector<8x256xf32>
    %35 = arith.mulf %27, %34 : vector<8x256xf32>
    %cst_27 = arith.constant dense<0.000000e+00> : vector<8xf32>
    %36 = vector.multi_reduction <add>, %35, %cst_27 [1] : vector<8x256xf32> to vector<8xf32>
    %37 = vector.shape_cast %36 : vector<8xf32> to vector<8x1xf32>
    %38 = tpu.iota {dimensions = array<i32: 1>} : vector<8x2xi32>
    %c0_i32 = arith.constant 0 : i32
    %39 = vector.broadcast %c0_i32 : i32 to vector<8x2xi32>
    %40 = arith.cmpi eq, %38, %39 : vector<8x2xi32>
    %41 = vector.shape_cast %32 : vector<8x1xf32> to vector<8x1xf32>
    %42 = vector.broadcast %41 : vector<8x1xf32> to vector<8x2xf32>
    %43 = vector.shape_cast %37 : vector<8x1xf32> to vector<8x1xf32>
    %44 = vector.broadcast %43 : vector<8x1xf32> to vector<8x2xf32>
    %45 = arith.select %40, %42, %44 : vector<8x2xi1>, vector<8x2xf32>
    %c0_28 = arith.constant 0 : index
    %c0_29 = arith.constant 0 : index
    %46 = vector.load %arg11[%c0_28, %c0_29] : memref<1x2xf32, #tpu.memory_space<vmem>>, vector<1x2xf32>
    %47 = vector.broadcast %46 : vector<1x2xf32> to vector<8x2xf32>
    %48 = arith.addf %45, %47 : vector<8x2xf32>
    %c0_30 = arith.constant 0 : index
    %c0_31 = arith.constant 0 : index
    %49 = vector.load %arg12[%c0_30, %c0_31] : memref<8x2xf32, #tpu.memory_space<vmem>>, vector<8x2xf32>
    tpu.vector_store %arg12[%c0_30, %c0_31], %48 {strides = array<i32>} : memref<8x2xf32, #tpu.memory_space<vmem>>, vector<8x2xf32>,
    return
  }
  func.func @transform_0(%arg0: i32) -> (i32, i32) {
    %c0_i32 = arith.constant 0 : i32
    %c0_i32_0 = arith.constant 0 : i32
    return %arg0, %c0_i32 : i32, i32
  }
  func.func @transform_1(%arg0: i32) -> (i32, i32) {
    %c0_i32 = arith.constant 0 : i32
    %c0_i32_0 = arith.constant 0 : i32
    return %arg0, %c0_i32 : i32, i32
  }
  func.func @transform_2(%arg0: i32) -> (i32, i32) {
    %c0_i32 = arith.constant 0 : i32
    %c0_i32_0 = arith.constant 0 : i32
    %c0_i32_1 = arith.constant 0 : i32
    return %c0_i32, %c0_i32_0 : i32, i32
  }
  func.func @transform_3(%arg0: i32) -> (i32, i32) {
    %c0_i32 = arith.constant 0 : i32
    %c0_i32_0 = arith.constant 0 : i32
    %c0_i32_1 = arith.constant 0 : i32
    return %c0_i32, %c0_i32_0 : i32, i32
  }
  func.func @transform_4(%arg0: i32) -> (i32, i32) {
    %c0_i32 = arith.constant 0 : i32
    %c0_i32_0 = arith.constant 0 : i32
    %c0_i32_1 = arith.constant 0 : i32
    return %c0_i32, %c0_i32_0 : i32, i32
  }
  func.func @transform_5(%arg0: i32) -> (i32, i32) {
    %c0_i32 = arith.constant 0 : i32
    %c0_i32_0 = arith.constant 0 : i32
    %c0_i32_1 = arith.constant 0 : i32
    return %c0_i32, %c0_i32_0 : i32, i32
  }
  func.func @transform_6(%arg0: i32) -> (i32, i32) {
    %c0_i32 = arith.constant 0 : i32
    %c0_i32_0 = arith.constant 0 : i32
    %c0_i32_1 = arith.constant 0 : i32
    return %c0_i32, %c0_i32_0 : i32, i32
  }
  func.func @transform_7(%arg0: i32) -> (i32, i32) {
    %c0_i32 = arith.constant 0 : i32
    %c0_i32_0 = arith.constant 0 : i32
    %c0_i32_1 = arith.constant 0 : i32
    return %c0_i32, %c0_i32_0 : i32, i32
  }
  func.func @transform_8(%arg0: i32) -> (i32, i32) {
    %c0_i32 = arith.constant 0 : i32
    %c0_i32_0 = arith.constant 0 : i32
    %c0_i32_1 = arith.constant 0 : i32
    return %c0_i32, %c0_i32_0 : i32, i32
  }
  func.func @transform_9(%arg0: i32) -> (i32, i32) {
    %c0_i32 = arith.constant 0 : i32
    %c0_i32_0 = arith.constant 0 : i32
    %c0_i32_1 = arith.constant 0 : i32
    return %c0_i32, %c0_i32_0 : i32, i32
  }
  func.func @transform_10(%arg0: i32) -> (i32, i32) {
    %c0_i32 = arith.constant 0 : i32
    %c0_i32_0 = arith.constant 0 : i32
    %c0_i32_1 = arith.constant 0 : i32
    return %c0_i32, %c0_i32_0 : i32, i32
  }
  func.func @transform_11(%arg0: i32) -> (i32, i32) {
    %c0_i32 = arith.constant 0 : i32
    %c0_i32_0 = arith.constant 0 : i32
    return %arg0, %c0_i32 : i32, i32
  }
}

</mosaic_0001>

<llo_original>
// kernel: tpu_custom_call.1
$region0: #{tpu_custom_call.1}
  #allocation0 [shape = 'u32[]', space=smem, size = 0x4, offset = 0x4, fixed_abs, tag = 'smem constant byte address 0x4 - core index']
  #allocation1 [shape = 'u32[144,128]{1,0:T(1,128)}', space=vmem, size = 0x12000, scoped, tag = 'internal scratch']
  %s0 = inlined_call_operand.hbm [shape: f32[8,16], index: 0, kind: input, shape index: {}]
  %s1 = inlined_call_operand.hbm [shape: f32[8,8], index: 1, kind: input, shape index: {}]
  %s2 = inlined_call_operand.hbm [shape: f32[16,512], index: 2, kind: input, shape index: {}]
  %s3 = inlined_call_operand.hbm [shape: f32[8,512], index: 3, kind: input, shape index: {}]
  %s4 = inlined_call_operand.vmem [shape: f32[1,512], index: 4, kind: input, shape index: {}]
  %s5 = inlined_call_operand.hbm [shape: f32[256,256], index: 5, kind: input, shape index: {}]
  %s6 = inlined_call_operand.vmem [shape: f32[1,256], index: 6, kind: input, shape index: {}]
  %s7 = inlined_call_operand.hbm [shape: f32[256,256], index: 7, kind: input, shape index: {}]
  %s8 = inlined_call_operand.vmem [shape: f32[1,256], index: 8, kind: input, shape index: {}]
  %s9 = inlined_call_operand.vmem [shape: f32[2,256], index: 9, kind: input, shape index: {}]
  %s10 = inlined_call_operand.vmem [shape: f32[1,2], index: 10, kind: input, shape index: {}]
  %s11 = inlined_call_operand.vmem [shape: f32[8,2], index: 11, kind: output, shape index: {}]
  %s12 = sld [smem:[#allocation0]]
  $region78: #{tpu_custom_call.1} parent=0
    _
  %s14 = ssub.s32 1, %s12
  %s15 = scalar_select 0, %s14, %s12
  $region1: #{tpu_custom_call.1} parent=0
    #allocation2 [shape = 'u8[4096]{0}', space=vmem, size = 0x1000, scoped, tag = 'input window, operand 0, single buffered']
    #allocation3 [shape = 's32[1]{0}', space=sflag, size = 0x4, scoped, tag = 'scoped memory for tpu_custom_call.1']
    #allocation4 [shape = 'u8[4096]{0}', space=vmem, size = 0x1000, scoped, tag = 'input window, operand 1, single buffered']
    #allocation5 [shape = 's32[1]{0}', space=sflag, size = 0x4, scoped, tag = 'scoped memory for tpu_custom_call.1']
    #allocation6 [shape = 'u8[32768]{0}', space=vmem, size = 0x8000, scoped, tag = 'input window, operand 2, single buffered']
    #allocation7 [shape = 'u8[16384]{0}', space=vmem, size = 0x4000, scoped, tag = 'input window, operand 3, single buffered']
    #allocation8 [shape = 's32[1]{0}', space=sflag, size = 0x4, scoped, tag = 'scoped memory for tpu_custom_call.1']
    #allocation9 [shape = 'u8[262144]{0}', space=vmem, size = 0x40000, scoped, tag = 'input window, operand 5, single buffered']
    #allocation10 [shape = 'u8[262144]{0}', space=vmem, size = 0x40000, scoped, tag = 'input window, operand 7, single buffered']
    #allocation11 [shape = 's32[1]{0}', space=sflag, size = 0x4, scoped, tag = 'scoped memory for tpu_custom_call.1']
    %16 = vsyncpa [#allocation3], 0
    %17 = vsyncpa [#allocation5], 0
    %18 = vsyncpa [#allocation8], 0
    %19 = vsyncpa [#allocation11], 0
    // Predicated region
    $region2: #{tpu_custom_call.1} parent=1 // pred_check
      _
    $region3: #{tpu_custom_call.1} parent=1 // pred_check_branch
      %21 = sbr.rel (0) target = $region5
    $region4: #{tpu_custom_call.1} parent=1 // pred_region
      %s23 = ssub.s32 128, 128
      %24 = vsyncadd [#allocation3], %s23
      %s26 = sshll.u32 [#allocation2], 4
      %s27 = int_to_ptr.vmem [resolvable:$true] %s26
      %29 = dma.hbm_to_vmem [thread:$0]  %s0, 128, %s27, [#allocation3]
    $region5: #{tpu_custom_call.1} parent=1 // pred_fallthru
      _
    // Predicated region
    $region6: #{tpu_custom_call.1} parent=1 // pred_check
      _
    $region7: #{tpu_custom_call.1} parent=1 // pred_check_branch
      %31 = sbr.rel (0) target = $region9
    $region8: #{tpu_custom_call.1} parent=1 // pred_region
      %s33 = ssub.s32 128, 128
      %34 = vsyncadd [#allocation5], %s33
      %s36 = sshll.u32 [#allocation4], 4
      %s37 = int_to_ptr.vmem [resolvable:$true] %s36
      %39 = dma.hbm_to_vmem [thread:$0]  %s1, 128, %s37, [#allocation5]
    $region9: #{tpu_custom_call.1} parent=1 // pred_fallthru
      _
    // Predicated region
    $region10: #{tpu_custom_call.1} parent=1 // pred_check
      _
    $region11: #{tpu_custom_call.1} parent=1 // pred_check_branch
      %41 = sbr.rel (0) target = $region13
    $region12: #{tpu_custom_call.1} parent=1 // pred_region
      %s43 = ssub.s32 1024, 1024
      %44 = vsyncadd [#allocation5], %s43
      %s45 = sshll.u32 [#allocation6], 4
      %s46 = int_to_ptr.vmem [resolvable:$true] %s45
      %51 = dma.hbm_to_vmem [thread:$0]  %s2, 1024, %s46, [#allocation5], 512, 512, 32
    $region13: #{tpu_custom_call.1} parent=1 // pred_fallthru
      _
    // Predicated region
    $region14: #{tpu_custom_call.1} parent=1 // pred_check
      _
    $region15: #{tpu_custom_call.1} parent=1 // pred_check_branch
      %53 = sbr.rel (0) target = $region17
    $region16: #{tpu_custom_call.1} parent=1 // pred_region
      %s55 = ssub.s32 512, 512
      %56 = vsyncadd [#allocation8], %s55
      %s58 = sshll.u32 [#allocation7], 4
      %s59 = int_to_ptr.vmem [resolvable:$true] %s58
      %61 = dma.hbm_to_vmem [thread:$0]  %s3, 512, %s59, [#allocation8]
    $region17: #{tpu_custom_call.1} parent=1 // pred_fallthru
      _
    // Predicated region
    $region18: #{tpu_custom_call.1} parent=1 // pred_check
      _
    $region19: #{tpu_custom_call.1} parent=1 // pred_check_branch
      %63 = sbr.rel (0) target = $region21
    $region20: #{tpu_custom_call.1} parent=1 // pred_region
      _
    $region21: #{tpu_custom_call.1} parent=1 // pred_fallthru
      _
    // Predicated region
    $region22: #{tpu_custom_call.1} parent=1 // pred_check
      _
    $region23: #{tpu_custom_call.1} parent=1 // pred_check_branch
      %65 = sbr.rel (0) target = $region25
    $region24: #{tpu_custom_call.1} parent=1 // pred_region
      %s67 = ssub.s32 8192, 8192
      %68 = vsyncadd [#allocation8], %s67
      %s69 = sshll.u32 [#allocation9], 4
      %s70 = int_to_ptr.vmem [resolvable:$true] %s69
      %75 = dma.hbm_to_vmem [thread:$0]  %s5, 8192, %s70, [#allocation8], 256, 256, 16
    $region25: #{tpu_custom_call.1} parent=1 // pred_fallthru
      _
    // Predicated region
    $region26: #{tpu_custom_call.1} parent=1 // pred_check
      _
    $region27: #{tpu_custom_call.1} parent=1 // pred_check_branch
      %77 = sbr.rel (0) target = $region29
    $region28: #{tpu_custom_call.1} parent=1 // pred_region
      _
    $region29: #{tpu_custom_call.1} parent=1 // pred_fallthru
      _
    // Predicated region
    $region30: #{tpu_custom_call.1} parent=1 // pred_check
      _
    $region31: #{tpu_custom_call.1} parent=1 // pred_check_branch
      %79 = sbr.rel (0) target = $region33
    $region32: #{tpu_custom_call.1} parent=1 // pred_region
      %s81 = ssub.s32 8192, 8192
      %82 = vsyncadd [#allocation11], %s81
      %s83 = sshll.u32 [#allocation10], 4
      %s84 = int_to_ptr.vmem [resolvable:$true] %s83
      %89 = dma.hbm_to_vmem [thread:$0]  %s7, 8192, %s84, [#allocation11], 256, 256, 16
    $region33: #{tpu_custom_call.1} parent=1 // pred_fallthru
      _
    // Predicated region
    $region34: #{tpu_custom_call.1} parent=1 // pred_check
      _
    $region35: #{tpu_custom_call.1} parent=1 // pred_check_branch
      %91 = sbr.rel (0) target = $region37
    $region36: #{tpu_custom_call.1} parent=1 // pred_region
      _
    $region37: #{tpu_custom_call.1} parent=1 // pred_fallthru
      _
    // Predicated region
    $region38: #{tpu_custom_call.1} parent=1 // pred_check
      _
    $region39: #{tpu_custom_call.1} parent=1 // pred_check_branch
      %93 = sbr.rel (0) target = $region41
    $region40: #{tpu_custom_call.1} parent=1 // pred_region
      _
    $region41: #{tpu_custom_call.1} parent=1 // pred_fallthru
      _
    // Predicated region
    $region42: #{tpu_custom_call.1} parent=1 // pred_check
      _
    $region43: #{tpu_custom_call.1} parent=1 // pred_check_branch
      %95 = sbr.rel (0) target = $region45
    $region44: #{tpu_custom_call.1} parent=1 // pred_region
      _
    $region45: #{tpu_custom_call.1} parent=1 // pred_fallthru
      _
    // Predicated region
    $region46: #{tpu_custom_call.1} parent=1 // pred_check
      _
    $region47: #{tpu_custom_call.1} parent=1 // pred_check_branch
      %97 = sbr.rel (0) target = $region49
    $region48: #{tpu_custom_call.1} parent=1 // pred_region
      %98 = dma.done [#allocation3], 128
    $region49: #{tpu_custom_call.1} parent=1 // pred_fallthru
      _
    // Predicated region
    $region50: #{tpu_custom_call.1} parent=1 // pred_check
      _
    $region51: #{tpu_custom_call.1} parent=1 // pred_check_branch
      %100 = sbr.rel (0) target = $region53
    $region52: #{tpu_custom_call.1} parent=1 // pred_region
      %101 = dma.done [#allocation5], 128
    $region53: #{tpu_custom_call.1} parent=1 // pred_fallthru
      _
    // Predicated region
    $region54: #{tpu_custom_call.1} parent=1 // pred_check
      _
    $region55: #{tpu_custom_call.1} parent=1 // pred_check_branch
      %103 = sbr.rel (0) target = $region57
    $region56: #{tpu_custom_call.1} parent=1 // pred_region
      %104 = dma.done [#allocation5], 1024
    $region57: #{tpu_custom_call.1} parent=1 // pred_fallthru
      _
    // Predicated region
    $region58: #{tpu_custom_call.1} parent=1 // pred_check
      _
    $region59: #{tpu_custom_call.1} parent=1 // pred_check_branch
      %106 = sbr.rel (0) target = $region61
    $region60: #{tpu_custom_call.1} parent=1 // pred_region
      %107 = dma.done [#allocation8], 512
    $region61: #{tpu_custom_call.1} parent=1 // pred_fallthru
      _
    // Predicated region
    $region62: #{tpu_custom_call.1} parent=1 // pred_check
      _
    $region63: #{tpu_custom_call.1} parent=1 // pred_check_branch
      %109 = sbr.rel (0) target = $region65
    $region64: #{tpu_custom_call.1} parent=1 // pred_region
      %110 = dma.done [#allocation8], 8192
    $region65: #{tpu_custom_call.1} parent=1 // pred_fallthru
      _
    // Predicated region
    $region66: #{tpu_custom_call.1} parent=1 // pred_check
      _
    $region67: #{tpu_custom_call.1} parent=1 // pred_check_branch
      %112 = sbr.rel (0) target = $region69
    $region68: #{tpu_custom_call.1} parent=1 // pred_region
      %113 = dma.done [#allocation11], 8192
    $region69: #{tpu_custom_call.1} parent=1 // pred_fallthru
      _
    %v114 = vld [vmem:[#allocation2] sm:$0xff]
    %v115 = vld [vmem:[#allocation4] sm:$0xff]
    %v116 = vld [vmem:[#allocation6] sm:$0xff]
    %v117 = vld [vmem:[#allocation6 + $0x8] sm:$0xff]
    %v118 = vld [vmem:[#allocation6 + $0x10] sm:$0xff]
    %v119 = vld [vmem:[#allocation6 + $0x18] sm:$0xff]
    %v120 = vld [vmem:[#allocation6 + $0x20] sm:$0xff]
    %v121 = vld [vmem:[#allocation6 + $0x28] sm:$0xff]
    %v122 = vld [vmem:[#allocation6 + $0x30] sm:$0xff]
    %v123 = vld [vmem:[#allocation6 + $0x38] sm:$0xff]
    %v124 = vld [vmem:[#allocation7] sm:$0xff]
    %v125 = vld [vmem:[#allocation7 + $0x8] sm:$0xff]
    %v126 = vld [vmem:[#allocation7 + $0x10] sm:$0xff]
    %v127 = vld [vmem:[#allocation7 + $0x18] sm:$0xff]
    %vm128 = vcmask 64512
    %v130 = vsel %vm128, %v115, 0
    %132 = vmatprep.subr.mxu0 %v125
    %133 = vmatpush1.msra.mxu0 %v124
    %134 = vmatprep.subr.mxu0 0.0
    %135 = vmatpush1.msra.mxu0 0.0
    %136 = vmatprep.subr.mxu0 0.0
    %137 = vmatpush1.msra.mxu0 0.0
    %138 = vmatprep.subr.mxu0 0.0
    %139 = vmatpush1.msra.mxu0 0.0
    %140 = vmatprep.subr.mxu0 0.0
    %141 = vmatpush1.msra.mxu0 0.0
    %142 = vmatprep.subr.mxu0 0.0
    %143 = vmatpush1.msra.mxu0 0.0
    %144 = vmatprep.subr.mxu0 0.0
    %145 = vmatpush1.msra.mxu0 0.0
    %146 = vmatprep.subr.mxu0 0.0
    %147 = vmatpush1.msra.mxu0 0.0
    %148 = vmatprep.subr.mxu0 0.0
    %149 = vmatpush1.msra.mxu0 0.0
    %150 = vmatprep.subr.mxu0 0.0
    %151 = vmatpush1.msra.mxu0 0.0
    %152 = vmatprep.subr.mxu0 0.0
    %153 = vmatpush1.msra.mxu0 0.0
    %154 = vmatprep.subr.mxu0 0.0
    %155 = vmatpush1.msra.mxu0 0.0
    %156 = vmatprep.subr.mxu0 0.0
    %157 = vmatpush1.msra.mxu0 0.0
    %158 = vmatprep.subr.mxu0 0.0
    %159 = vmatpush1.msra.mxu0 0.0
    %160 = vmatprep.subr.mxu0 0.0
    %161 = vmatpush1.msra.mxu0 0.0
    %162 = vmatprep.subr.mxu0 0.0
    %163 = vmatpush1.msra.mxu0 0.0
    %164 = vmatprep.subr.mxu0 0.0
    %165 = vmatpush1.msra.mxu0 0.0
    %166 = vmatprep.subr.mxu0 0.0
    %167 = vmatpush1.msra.mxu0 0.0
    %168 = vmatprep.subr.mxu0 0.0
    %169 = vmatpush1.msra.mxu0 0.0
    %170 = vmatprep.subr.mxu0 0.0
    %171 = vmatpush1.msra.mxu0 0.0
    %172 = vmatprep.subr.mxu0 0.0
    %173 = vmatpush1.msra.mxu0 0.0
    %174 = vmatprep.subr.mxu0 0.0
    %175 = vmatpush1.msra.mxu0 0.0
    %176 = vmatprep.subr.mxu0 0.0
    %177 = vmatpush1.msra.mxu0 0.0
    %178 = vmatprep.subr.mxu0 0.0
    %179 = vmatpush1.msra.mxu0 0.0
    %180 = vmatprep.subr.mxu0 0.0
    %181 = vmatpush1.msra.mxu0 0.0
    %182 = vmatprep.subr.mxu0 0.0
    %183 = vmatpush1.msra.mxu0 0.0
    %184 = vmatprep.subr.mxu0 0.0
    %185 = vmatpush1.msra.mxu0 0.0
    %186 = vmatprep.subr.mxu0 0.0
    %187 = vmatpush1.msra.mxu0 0.0
    %188 = vmatprep.subr.mxu0 0.0
    %189 = vmatpush1.msra.mxu0 0.0
    %190 = vmatprep.subr.mxu0 0.0
    %191 = vmatpush1.msra.mxu0 0.0
    %192 = vmatprep.subr.mxu0 0.0
    %193 = vmatpush1.msra.mxu0 0.0
    %194 = vmatprep.subr.mxu0 0.0
    %195 = vmatpush1.msra.mxu0 0.0
    %196 = vmatprep.mubr.f32.mxu0 0.0
    %197 = vmatmul.mubr.f32.gmra.mrb[0].mxu0 %v130
    %v198 = vpop.f32.mrb[0].mxu0
    %v199 = vadd.f32 0.0, %v198
    %v200 = vpop.f32.mrb[0].mxu0
    %v201 = vadd.f32 0.0, %v200
    %202 = vdwg.mxu0
    %203 = vmatprep.subr.mxu0 %v127
    %204 = vmatpush1.msra.mxu0 %v126
    %205 = vmatprep.subr.mxu0 0.0
    %206 = vmatpush1.msra.mxu0 0.0
    %207 = vmatprep.subr.mxu0 0.0
    %208 = vmatpush1.msra.mxu0 0.0
    %209 = vmatprep.subr.mxu0 0.0
    %210 = vmatpush1.msra.mxu0 0.0
    %211 = vmatprep.subr.mxu0 0.0
    %212 = vmatpush1.msra.mxu0 0.0
    %213 = vmatprep.subr.mxu0 0.0
    %214 = vmatpush1.msra.mxu0 0.0
    %215 = vmatprep.subr.mxu0 0.0
    %216 = vmatpush1.msra.mxu0 0.0
    %217 = vmatprep.subr.mxu0 0.0
    %218 = vmatpush1.msra.mxu0 0.0
    %219 = vmatprep.subr.mxu0 0.0
    %220 = vmatpush1.msra.mxu0 0.0
    %221 = vmatprep.subr.mxu0 0.0
    %222 = vmatpush1.msra.mxu0 0.0
    %223 = vmatprep.subr.mxu0 0.0
    %224 = vmatpush1.msra.mxu0 0.0
    %225 = vmatprep.subr.mxu0 0.0
    %226 = vmatpush1.msra.mxu0 0.0
    %227 = vmatprep.subr.mxu0 0.0
    %228 = vmatpush1.msra.mxu0 0.0
    %229 = vmatprep.subr.mxu0 0.0
    %230 = vmatpush1.msra.mxu0 0.0
    %231 = vmatprep.subr.mxu0 0.0
    %232 = vmatpush1.msra.mxu0 0.0
    %233 = vmatprep.subr.mxu0 0.0
    %234 = vmatpush1.msra.mxu0 0.0
    %235 = vmatprep.subr.mxu0 0.0
    %236 = vmatpush1.msra.mxu0 0.0
    %237 = vmatprep.subr.mxu0 0.0
    %238 = vmatpush1.msra.mxu0 0.0
    %239 = vmatprep.subr.mxu0 0.0
    %240 = vmatpush1.msra.mxu0 0.0
    %241 = vmatprep.subr.mxu0 0.0
    %242 = vmatpush1.msra.mxu0 0.0
    %243 = vmatprep.subr.mxu0 0.0
    %244 = vmatpush1.msra.mxu0 0.0
    %245 = vmatprep.subr.mxu0 0.0
    %246 = vmatpush1.msra.mxu0 0.0
    %247 = vmatprep.subr.mxu0 0.0
    %248 = vmatpush1.msra.mxu0 0.0
    %249 = vmatprep.subr.mxu0 0.0
    %250 = vmatpush1.msra.mxu0 0.0
    %251 = vmatprep.subr.mxu0 0.0
    %252 = vmatpush1.msra.mxu0 0.0
    %253 = vmatprep.subr.mxu0 0.0
    %254 = vmatpush1.msra.mxu0 0.0
    %255 = vmatprep.subr.mxu0 0.0
    %256 = vmatpush1.msra.mxu0 0.0
    %257 = vmatprep.subr.mxu0 0.0
    %258 = vmatpush1.msra.mxu0 0.0
    %259 = vmatprep.subr.mxu0 0.0
    %260 = vmatpush1.msra.mxu0 0.0
    %261 = vmatprep.subr.mxu0 0.0
    %262 = vmatpush1.msra.mxu0 0.0
    %263 = vmatprep.subr.mxu0 0.0
    %264 = vmatpush1.msra.mxu0 0.0
    %265 = vmatprep.subr.mxu0 0.0
    %266 = vmatpush1.msra.mxu0 0.0
    %267 = vmatprep.mubr.f32.mxu0 0.0
    %268 = vmatmul.mubr.f32.gmra.mrb[0].mxu0 %v130
    %v269 = vpop.f32.mrb[0].mxu0
    %v270 = vadd.f32 0.0, %v269
    %v271 = vpop.f32.mrb[0].mxu0
    %v272 = vadd.f32 0.0, %v271
    %273 = vdwg.mxu0
    %vm274 = vcmask 130048
    %v276 = vsel %vm274, %v114, 0
    %278 = vmatprep.subr.mxu0 %v117
    %279 = vmatpush1.msra.mxu0 %v116
    %280 = vmatprep.subr.mxu0 %v121
    %281 = vmatpush1.msra.mxu0 %v120
    %282 = vmatprep.subr.mxu0 0.0
    %283 = vmatpush1.msra.mxu0 0.0
    %284 = vmatprep.subr.mxu0 0.0
    %285 = vmatpush1.msra.mxu0 0.0
    %286 = vmatprep.subr.mxu0 0.0
    %287 = vmatpush1.msra.mxu0 0.0
    %288 = vmatprep.subr.mxu0 0.0
    %289 = vmatpush1.msra.mxu0 0.0
    %290 = vmatprep.subr.mxu0 0.0
    %291 = vmatpush1.msra.mxu0 0.0
    %292 = vmatprep.subr.mxu0 0.0
    %293 = vmatpush1.msra.mxu0 0.0
    %294 = vmatprep.subr.mxu0 0.0
    %295 = vmatpush1.msra.mxu0 0.0
    %296 = vmatprep.subr.mxu0 0.0
    %297 = vmatpush1.msra.mxu0 0.0
    %298 = vmatprep.subr.mxu0 0.0
    %299 = vmatpush1.msra.mxu0 0.0
    %300 = vmatprep.subr.mxu0 0.0
    %301 = vmatpush1.msra.mxu0 0.0
    %302 = vmatprep.subr.mxu0 0.0
    %303 = vmatpush1.msra.mxu0 0.0
    %304 = vmatprep.subr.mxu0 0.0
    %305 = vmatpush1.msra.mxu0 0.0
    %306 = vmatprep.subr.mxu0 0.0
    %307 = vmatpush1.msra.mxu0 0.0
    %308 = vmatprep.subr.mxu0 0.0
    %309 = vmatpush1.msra.mxu0 0.0
    %310 = vmatprep.subr.mxu0 0.0
    %311 = vmatpush1.msra.mxu0 0.0
    %312 = vmatprep.subr.mxu0 0.0
    %313 = vmatpush1.msra.mxu0 0.0
    %314 = vmatprep.subr.mxu0 0.0
    %315 = vmatpush1.msra.mxu0 0.0
    %316 = vmatprep.subr.mxu0 0.0
    %317 = vmatpush1.msra.mxu0 0.0
    %318 = vmatprep.subr.mxu0 0.0
    %319 = vmatpush1.msra.mxu0 0.0
    %320 = vmatprep.subr.mxu0 0.0
    %321 = vmatpush1.msra.mxu0 0.0
    %322 = vmatprep.subr.mxu0 0.0
    %323 = vmatpush1.msra.mxu0 0.0
    %324 = vmatprep.subr.mxu0 0.0
    %325 = vmatpush1.msra.mxu0 0.0
    %326 = vmatprep.subr.mxu0 0.0
    %327 = vmatpush1.msra.mxu0 0.0
    %328 = vmatprep.subr.mxu0 0.0
    %329 = vmatpush1.msra.mxu0 0.0
    %330 = vmatprep.subr.mxu0 0.0
    %331 = vmatpush1.msra.mxu0 0.0
    %332 = vmatprep.subr.mxu0 0.0
    %333 = vmatpush1.msra.mxu0 0.0
    %334 = vmatprep.subr.mxu0 0.0
    %335 = vmatpush1.msra.mxu0 0.0
    %336 = vmatprep.subr.mxu0 0.0
    %337 = vmatpush1.msra.mxu0 0.0
    %338 = vmatprep.subr.mxu0 0.0
    %339 = vmatpush1.msra.mxu0 0.0
    %340 = vmatprep.subr.mxu0 0.0
    %341 = vmatpush1.msra.mxu0 0.0
    %342 = vmatprep.mubr.f32.mxu0 0.0
    %343 = vmatmul.mubr.f32.gmra.mrb[0].mxu0 %v276
    %v344 = vpop.f32.mrb[0].mxu0
    %v345 = vadd.f32 %v199, %v344
    %v346 = vpop.f32.mrb[0].mxu0
    %v347 = vadd.f32 %v201, %v346
    %348 = vdwg.mxu0
    %349 = vmatprep.subr.mxu0 %v119
    %350 = vmatpush1.msra.mxu0 %v118
    %351 = vmatprep.subr.mxu0 %v123
    %352 = vmatpush1.msra.mxu0 %v122
    %353 = vmatprep.subr.mxu0 0.0
    %354 = vmatpush1.msra.mxu0 0.0
    %355 = vmatprep.subr.mxu0 0.0
    %356 = vmatpush1.msra.mxu0 0.0
    %357 = vmatprep.subr.mxu0 0.0
    %358 = vmatpush1.msra.mxu0 0.0
    %359 = vmatprep.subr.mxu0 0.0
    %360 = vmatpush1.msra.mxu0 0.0
    %361 = vmatprep.subr.mxu0 0.0
    %362 = vmatpush1.msra.mxu0 0.0
    %363 = vmatprep.subr.mxu0 0.0
    %364 = vmatpush1.msra.mxu0 0.0
    %365 = vmatprep.subr.mxu0 0.0
    %366 = vmatpush1.msra.mxu0 0.0
    %367 = vmatprep.subr.mxu0 0.0
    %368 = vmatpush1.msra.mxu0 0.0
    %369 = vmatprep.subr.mxu0 0.0
    %370 = vmatpush1.msra.mxu0 0.0
    %371 = vmatprep.subr.mxu0 0.0
    %372 = vmatpush1.msra.mxu0 0.0
    %373 = vmatprep.subr.mxu0 0.0
    %374 = vmatpush1.msra.mxu0 0.0
    %375 = vmatprep.subr.mxu0 0.0
    %376 = vmatpush1.msra.mxu0 0.0
    %377 = vmatprep.subr.mxu0 0.0
    %378 = vmatpush1.msra.mxu0 0.0
    %379 = vmatprep.subr.mxu0 0.0
    %380 = vmatpush1.msra.mxu0 0.0
    %381 = vmatprep.subr.mxu0 0.0
    %382 = vmatpush1.msra.mxu0 0.0
    %383 = vmatprep.subr.mxu0 0.0
    %384 = vmatpush1.msra.mxu0 0.0
    %385 = vmatprep.subr.mxu0 0.0
    %386 = vmatpush1.msra.mxu0 0.0
    %387 = vmatprep.subr.mxu0 0.0
    %388 = vmatpush1.msra.mxu0 0.0
    %389 = vmatprep.subr.mxu0 0.0
    %390 = vmatpush1.msra.mxu0 0.0
    %391 = vmatprep.subr.mxu0 0.0
    %392 = vmatpush1.msra.mxu0 0.0
    %393 = vmatprep.subr.mxu0 0.0
    %394 = vmatpush1.msra.mxu0 0.0
    %395 = vmatprep.subr.mxu0 0.0
    %396 = vmatpush1.msra.mxu0 0.0
    %397 = vmatprep.subr.mxu0 0.0
    %398 = vmatpush1.msra.mxu0 0.0
    %399 = vmatprep.subr.mxu0 0.0
    %400 = vmatpush1.msra.mxu0 0.0
    %401 = vmatprep.subr.mxu0 0.0
    %402 = vmatpush1.msra.mxu0 0.0
    %403 = vmatprep.subr.mxu0 0.0
    %404 = vmatpush1.msra.mxu0 0.0
    %405 = vmatprep.subr.mxu0 0.0
    %406 = vmatpush1.msra.mxu0 0.0
    %407 = vmatprep.subr.mxu0 0.0
    %408 = vmatpush1.msra.mxu0 0.0
    %409 = vmatprep.subr.mxu0 0.0
    %410 = vmatpush1.msra.mxu0 0.0
    %411 = vmatprep.subr.mxu0 0.0
    %412 = vmatpush1.msra.mxu0 0.0
    %413 = vmatprep.mubr.f32.mxu0 0.0
    %414 = vmatmul.mubr.f32.gmra.mrb[0].mxu0 %v276
    %v415 = vpop.f32.mrb[0].mxu0
    %v416 = vadd.f32 %v270, %v415
    %v417 = vpop.f32.mrb[0].mxu0
    %v418 = vadd.f32 %v272, %v417
    %419 = vdwg.mxu0
    %v420 = vld [vmem:[%s4] sm:$0xf]
    %v422 = vlaneseq
    %v423 = vshrl.u32 %v422, 7
    %v424 = vsub.s32 0, %v423
    %v425 = vrot.slane %v420, %v424
    %v426 = vlaneseq
    %v427 = vshrl.u32 %v426, 7
    %v428 = vsub.s32 1, %v427
    %v429 = vrot.slane %v420, %v428
    %v430 = vlaneseq
    %v431 = vshrl.u32 %v430, 7
    %v432 = vsub.s32 2, %v431
    %v433 = vrot.slane %v420, %v432
    %v434 = vlaneseq
    %v435 = vshrl.u32 %v434, 7
    %v436 = vsub.s32 3, %v435
    %v437 = vrot.slane %v420, %v436
    %v442 = vadd.f32 %v345, %v425
    %v443 = vadd.f32 %v347, %v429
    %v444 = vadd.f32 %v416, %v433
    %v445 = vadd.f32 %v418, %v437
    %v446 = vmax.f32 %v442, 0.0
    %v447 = vmax.f32 %v443, 0.0
    %v448 = vmax.f32 %v444, 0.0
    %v449 = vmax.f32 %v445, 0.0
    %v450 = vld [vmem:[#allocation9] sm:$0xff]
    %v451 = vld [vmem:[#allocation9 + $0x8] sm:$0xff]
    %v452 = vld [vmem:[#allocation9 + $0x10] sm:$0xff]
    %v453 = vld [vmem:[#allocation9 + $0x18] sm:$0xff]
    %v454 = vld [vmem:[#allocation9 + $0x20] sm:$0xff]
    %v455 = vld [vmem:[#allocation9 + $0x28] sm:$0xff]
    %v456 = vld [vmem:[#allocation9 + $0x30] sm:$0xff]
    %v457 = vld [vmem:[#allocation9 + $0x38] sm:$0xff]
    %v458 = vld [vmem:[#allocation9 + $0x40] sm:$0xff]
    %v459 = vld [vmem:[#allocation9 + $0x48] sm:$0xff]
    %v460 = vld [vmem:[#allocation9 + $0x50] sm:$0xff]
    %v461 = vld [vmem:[#allocation9 + $0x58] sm:$0xff]
    %v462 = vld [vmem:[#allocation9 + $0x60] sm:$0xff]
    %v463 = vld [vmem:[#allocation9 + $0x68] sm:$0xff]
    %v464 = vld [vmem:[#allocation9 + $0x70] sm:$0xff]
    %v465 = vld [vmem:[#allocation9 + $0x78] sm:$0xff]
    %v466 = vld [vmem:[#allocation9 + $0x80] sm:$0xff]
    %v467 = vld [vmem:[#allocation9 + $0x88] sm:$0xff]
    %v468 = vld [vmem:[#allocation9 + $0x90] sm:$0xff]
    %v469 = vld [vmem:[#allocation9 + $0x98] sm:$0xff]
    %v470 = vld [vmem:[#allocation9 + $0xa0] sm:$0xff]
    %v471 = vld [vmem:[#allocation9 + $0xa8] sm:$0xff]
    %v472 = vld [vmem:[#allocation9 + $0xb0] sm:$0xff]
    %v473 = vld [vmem:[#allocation9 + $0xb8] sm:$0xff]
    %v474 = vld [vmem:[#allocation9 + $0xc0] sm:$0xff]
    %v475 = vld [vmem:[#allocation9 + $0xc8] sm:$0xff]
    %v476 = vld [vmem:[#allocation9 + $0xd0] sm:$0xff]
    %v477 = vld [vmem:[#allocation9 + $0xd8] sm:$0xff]
    %v478 = vld [vmem:[#allocation9 + $0xe0] sm:$0xff]
    %v479 = vld [vmem:[#allocation9 + $0xe8] sm:$0xff]
    %v480 = vld [vmem:[#allocation9 + $0xf0] sm:$0xff]
    %v481 = vld [vmem:[#allocation9 + $0xf8] sm:$0xff]
    %v482 = vld [vmem:[#allocation9 + $0x100] sm:$0xff]
    %v483 = vld [vmem:[#allocation9 + $0x108] sm:$0xff]
    %v484 = vld [vmem:[#allocation9 + $0x110] sm:$0xff]
    %v485 = vld [vmem:[#allocation9 + $0x118] sm:$0xff]
    %v486 = vld [vmem:[#allocation9 + $0x120] sm:$0xff]
    %v487 = vld [vmem:[#allocation9 + $0x128] sm:$0xff]
    %v488 = vld [vmem:[#allocation9 + $0x130] sm:$0xff]
    %v489 = vld [vmem:[#allocation9 + $0x138] sm:$0xff]
    %v490 = vld [vmem:[#allocation9 + $0x140] sm:$0xff]
    %v491 = vld [vmem:[#allocation9 + $0x148] sm:$0xff]
    %v492 = vld [vmem:[#allocation9 + $0x150] sm:$0xff]
    %v493 = vld [vmem:[#allocation9 + $0x158] sm:$0xff]
    %v494 = vld [vmem:[#allocation9 + $0x160] sm:$0xff]
    %v495 = vld [vmem:[#allocation9 + $0x168] sm:$0xff]
    %v496 = vld [vmem:[#allocation9 + $0x170] sm:$0xff]
    %v497 = vld [vmem:[#allocation9 + $0x178] sm:$0xff]
    %v498 = vld [vmem:[#allocation9 + $0x180] sm:$0xff]
    %v499 = vld [vmem:[#allocation9 + $0x188] sm:$0xff]
    %v500 = vld [vmem:[#allocation9 + $0x190] sm:$0xff]
    %v501 = vld [vmem:[#allocation9 + $0x198] sm:$0xff]
    %v502 = vld [vmem:[#allocation9 + $0x1a0] sm:$0xff]
    %v503 = vld [vmem:[#allocation9 + $0x1a8] sm:$0xff]
    %v504 = vld [vmem:[#allocation9 + $0x1b0] sm:$0xff]
    %v505 = vld [vmem:[#allocation9 + $0x1b8] sm:$0xff]
    %v506 = vld [vmem:[#allocation9 + $0x1c0] sm:$0xff]
    %v507 = vld [vmem:[#allocation9 + $0x1c8] sm:$0xff]
    %v508 = vld [vmem:[#allocation9 + $0x1d0] sm:$0xff]
    %v509 = vld [vmem:[#allocation9 + $0x1d8] sm:$0xff]
    %v510 = vld [vmem:[#allocation9 + $0x1e0] sm:$0xff]
    %v511 = vld [vmem:[#allocation9 + $0x1e8] sm:$0xff]
    %v512 = vld [vmem:[#allocation9 + $0x1f0] sm:$0xff]
    %v513 = vld [vmem:[#allocation9 + $0x1f8] sm:$0xff]
    %v514 = vld [vmem:[%s6] sm:$0x3]
    %v516 = vlaneseq
    %v517 = vshrl.u32 %v516, 7
    %v518 = vsub.s32 0, %v517
    %v519 = vrot.slane %v514, %v518
    %v520 = vlaneseq
    %v521 = vshrl.u32 %v520, 7
    %v522 = vsub.s32 1, %v521
    %v523 = vrot.slane %v514, %v522
    %526 = vmatprep.subr.mxu0 %v451
    %527 = vmatpush1.msra.mxu0 %v450
    %528 = vmatprep.subr.mxu0 %v453
    %529 = vmatpush1.msra.mxu0 %v452
    %530 = vmatprep.subr.mxu0 %v455
    %531 = vmatpush1.msra.mxu0 %v454
    %532 = vmatprep.subr.mxu0 %v457
    %533 = vmatpush1.msra.mxu0 %v456
    %534 = vmatprep.subr.mxu0 %v459
    %535 = vmatpush1.msra.mxu0 %v458
    %536 = vmatprep.subr.mxu0 %v461
    %537 = vmatpush1.msra.mxu0 %v460
    %538 = vmatprep.subr.mxu0 %v463
    %539 = vmatpush1.msra.mxu0 %v462
    %540 = vmatprep.subr.mxu0 %v465
    %541 = vmatpush1.msra.mxu0 %v464
    %542 = vmatprep.subr.mxu0 %v467
    %543 = vmatpush1.msra.mxu0 %v466
    %544 = vmatprep.subr.mxu0 %v469
    %545 = vmatpush1.msra.mxu0 %v468
    %546 = vmatprep.subr.mxu0 %v471
    %547 = vmatpush1.msra.mxu0 %v470
    %548 = vmatprep.subr.mxu0 %v473
    %549 = vmatpush1.msra.mxu0 %v472
    %550 = vmatprep.subr.mxu0 %v475
    %551 = vmatpush1.msra.mxu0 %v474
    %552 = vmatprep.subr.mxu0 %v477
    %553 = vmatpush1.msra.mxu0 %v476
    %554 = vmatprep.subr.mxu0 %v479
    %555 = vmatpush1.msra.mxu0 %v478
    %556 = vmatprep.subr.mxu0 %v481
    %557 = vmatpush1.msra.mxu0 %v480
    %558 = vmatprep.subr.mxu0 %v483
    %559 = vmatpush1.msra.mxu0 %v482
    %560 = vmatprep.subr.mxu0 %v485
    %561 = vmatpush1.msra.mxu0 %v484
    %562 = vmatprep.subr.mxu0 %v487
    %563 = vmatpush1.msra.mxu0 %v486
    %564 = vmatprep.subr.mxu0 %v489
    %565 = vmatpush1.msra.mxu0 %v488
    %566 = vmatprep.subr.mxu0 %v491
    %567 = vmatpush1.msra.mxu0 %v490
    %568 = vmatprep.subr.mxu0 %v493
    %569 = vmatpush1.msra.mxu0 %v492
    %570 = vmatprep.subr.mxu0 %v495
    %571 = vmatpush1.msra.mxu0 %v494
    %572 = vmatprep.subr.mxu0 %v497
    %573 = vmatpush1.msra.mxu0 %v496
    %574 = vmatprep.subr.mxu0 %v499
    %575 = vmatpush1.msra.mxu0 %v498
    %576 = vmatprep.subr.mxu0 %v501
    %577 = vmatpush1.msra.mxu0 %v500
    %578 = vmatprep.subr.mxu0 %v503
    %579 = vmatpush1.msra.mxu0 %v502
    %580 = vmatprep.subr.mxu0 %v505
    %581 = vmatpush1.msra.mxu0 %v504
    %582 = vmatprep.subr.mxu0 %v507
    %583 = vmatpush1.msra.mxu0 %v506
    %584 = vmatprep.subr.mxu0 %v509
    %585 = vmatpush1.msra.mxu0 %v508
    %586 = vmatprep.subr.mxu0 %v511
    %587 = vmatpush1.msra.mxu0 %v510
    %588 = vmatprep.subr.mxu0 %v513
    %589 = vmatpush1.msra.mxu0 %v512
    %590 = vmatprep.mubr.f32.mxu0 %v447
    %591 = vmatmul.mubr.f32.gmra.mrb[0].mxu0 %v446
    %v592 = vpop.f32.mrb[0].mxu0
    %v593 = vadd.f32 %v519, %v592
    %v594 = vpop.f32.mrb[0].mxu0
    %v595 = vadd.f32 %v523, %v594
    %596 = vdwg.mxu0
    %v597 = vmax.f32 %v593, 0.0
    %v598 = vmax.f32 %v595, 0.0
    %v599 = vld [vmem:[#allocation10] sm:$0xff]
    %v600 = vld [vmem:[#allocation10 + $0x8] sm:$0xff]
    %v601 = vld [vmem:[#allocation10 + $0x10] sm:$0xff]
    %v602 = vld [vmem:[#allocation10 + $0x18] sm:$0xff]
    %v603 = vld [vmem:[#allocation10 + $0x20] sm:$0xff]
    %v604 = vld [vmem:[#allocation10 + $0x28] sm:$0xff]
    %v605 = vld [vmem:[#allocation10 + $0x30] sm:$0xff]
    %v606 = vld [vmem:[#allocation10 + $0x38] sm:$0xff]
    %v607 = vld [vmem:[#allocation10 + $0x40] sm:$0xff]
    %v608 = vld [vmem:[#allocation10 + $0x48] sm:$0xff]
    %v609 = vld [vmem:[#allocation10 + $0x50] sm:$0xff]
    %v610 = vld [vmem:[#allocation10 + $0x58] sm:$0xff]
    %v611 = vld [vmem:[#allocation10 + $0x60] sm:$0xff]
    %v612 = vld [vmem:[#allocation10 + $0x68] sm:$0xff]
    %v613 = vld [vmem:[#allocation10 + $0x70] sm:$0xff]
    %v614 = vld [vmem:[#allocation10 + $0x78] sm:$0xff]
    %v615 = vld [vmem:[#allocation10 + $0x80] sm:$0xff]
    %v616 = vld [vmem:[#allocation10 + $0x88] sm:$0xff]
    %v617 = vld [vmem:[#allocation10 + $0x90] sm:$0xff]
    %v618 = vld [vmem:[#allocation10 + $0x98] sm:$0xff]
    %v619 = vld [vmem:[#allocation10 + $0xa0] sm:$0xff]
    %v620 = vld [vmem:[#allocation10 + $0xa8] sm:$0xff]
    %v621 = vld [vmem:[#allocation10 + $0xb0] sm:$0xff]
    %v622 = vld [vmem:[#allocation10 + $0xb8] sm:$0xff]
    %v623 = vld [vmem:[#allocation10 + $0xc0] sm:$0xff]
    %v624 = vld [vmem:[#allocation10 + $0xc8] sm:$0xff]
    %v625 = vld [vmem:[#allocation10 + $0xd0] sm:$0xff]
    %v626 = vld [vmem:[#allocation10 + $0xd8] sm:$0xff]
    %v627 = vld [vmem:[#allocation10 + $0xe0] sm:$0xff]
    %v628 = vld [vmem:[#allocation10 + $0xe8] sm:$0xff]
    %v629 = vld [vmem:[#allocation10 + $0xf0] sm:$0xff]
    %v630 = vld [vmem:[#allocation10 + $0xf8] sm:$0xff]
    %v631 = vld [vmem:[#allocation10 + $0x100] sm:$0xff]
    %v632 = vld [vmem:[#allocation10 + $0x108] sm:$0xff]
    %v633 = vld [vmem:[#allocation10 + $0x110] sm:$0xff]
    %v634 = vld [vmem:[#allocation10 + $0x118] sm:$0xff]
    %v635 = vld [vmem:[#allocation10 + $0x120] sm:$0xff]
    %v636 = vld [vmem:[#allocation10 + $0x128] sm:$0xff]
    %v637 = vld [vmem:[#allocation10 + $0x130] sm:$0xff]
    %v638 = vld [vmem:[#allocation10 + $0x138] sm:$0xff]
    %v639 = vld [vmem:[#allocation10 + $0x140] sm:$0xff]
    %v640 = vld [vmem:[#allocation10 + $0x148] sm:$0xff]
    %v641 = vld [vmem:[#allocation10 + $0x150] sm:$0xff]
    %v642 = vld [vmem:[#allocation10 + $0x158] sm:$0xff]
    %v643 = vld [vmem:[#allocation10 + $0x160] sm:$0xff]
    %v644 = vld [vmem:[#allocation10 + $0x168] sm:$0xff]
    %v645 = vld [vmem:[#allocation10 + $0x170] sm:$0xff]
    %v646 = vld [vmem:[#allocation10 + $0x178] sm:$0xff]
    %v647 = vld [vmem:[#allocation10 + $0x180] sm:$0xff]
    %v648 = vld [vmem:[#allocation10 + $0x188] sm:$0xff]
    %v649 = vld [vmem:[#allocation10 + $0x190] sm:$0xff]
    %v650 = vld [vmem:[#allocation10 + $0x198] sm:$0xff]
    %v651 = vld [vmem:[#allocation10 + $0x1a0] sm:$0xff]
    %v652 = vld [vmem:[#allocation10 + $0x1a8] sm:$0xff]
    %v653 = vld [vmem:[#allocation10 + $0x1b0] sm:$0xff]
    %v654 = vld [vmem:[#allocation10 + $0x1b8] sm:$0xff]
    %v655 = vld [vmem:[#allocation10 + $0x1c0] sm:$0xff]
    %v656 = vld [vmem:[#allocation10 + $0x1c8] sm:$0xff]
    %v657 = vld [vmem:[#allocation10 + $0x1d0] sm:$0xff]
    %v658 = vld [vmem:[#allocation10 + $0x1d8] sm:$0xff]
    %v659 = vld [vmem:[#allocation10 + $0x1e0] sm:$0xff]
    %v660 = vld [vmem:[#allocation10 + $0x1e8] sm:$0xff]
    %v661 = vld [vmem:[#allocation10 + $0x1f0] sm:$0xff]
    %v662 = vld [vmem:[#allocation10 + $0x1f8] sm:$0xff]
    %v663 = vld [vmem:[%s8] sm:$0x3]
    %v665 = vlaneseq
    %v666 = vshrl.u32 %v665, 7
    %v667 = vsub.s32 0, %v666
    %v668 = vrot.slane %v663, %v667
    %v669 = vlaneseq
    %v670 = vshrl.u32 %v669, 7
    %v671 = vsub.s32 1, %v670
    %v672 = vrot.slane %v663, %v671
    %675 = vmatprep.subr.mxu0 %v600
    %676 = vmatpush1.msra.mxu0 %v599
    %677 = vmatprep.subr.mxu0 %v602
    %678 = vmatpush1.msra.mxu0 %v601
    %679 = vmatprep.subr.mxu0 %v604
    %680 = vmatpush1.msra.mxu0 %v603
    %681 = vmatprep.subr.mxu0 %v606
    %682 = vmatpush1.msra.mxu0 %v605
    %683 = vmatprep.subr.mxu0 %v608
    %684 = vmatpush1.msra.mxu0 %v607
    %685 = vmatprep.subr.mxu0 %v610
    %686 = vmatpush1.msra.mxu0 %v609
    %687 = vmatprep.subr.mxu0 %v612
    %688 = vmatpush1.msra.mxu0 %v611
    %689 = vmatprep.subr.mxu0 %v614
    %690 = vmatpush1.msra.mxu0 %v613
    %691 = vmatprep.subr.mxu0 %v616
    %692 = vmatpush1.msra.mxu0 %v615
    %693 = vmatprep.subr.mxu0 %v618
    %694 = vmatpush1.msra.mxu0 %v617
    %695 = vmatprep.subr.mxu0 %v620
    %696 = vmatpush1.msra.mxu0 %v619
    %697 = vmatprep.subr.mxu0 %v622
    %698 = vmatpush1.msra.mxu0 %v621
    %699 = vmatprep.subr.mxu0 %v624
    %700 = vmatpush1.msra.mxu0 %v623
    %701 = vmatprep.subr.mxu0 %v626
    %702 = vmatpush1.msra.mxu0 %v625
    %703 = vmatprep.subr.mxu0 %v628
    %704 = vmatpush1.msra.mxu0 %v627
    %705 = vmatprep.subr.mxu0 %v630
    %706 = vmatpush1.msra.mxu0 %v629
    %707 = vmatprep.subr.mxu0 %v632
    %708 = vmatpush1.msra.mxu0 %v631
    %709 = vmatprep.subr.mxu0 %v634
    %710 = vmatpush1.msra.mxu0 %v633
    %711 = vmatprep.subr.mxu0 %v636
    %712 = vmatpush1.msra.mxu0 %v635
    %713 = vmatprep.subr.mxu0 %v638
    %714 = vmatpush1.msra.mxu0 %v637
    %715 = vmatprep.subr.mxu0 %v640
    %716 = vmatpush1.msra.mxu0 %v639
    %717 = vmatprep.subr.mxu0 %v642
    %718 = vmatpush1.msra.mxu0 %v641
    %719 = vmatprep.subr.mxu0 %v644
    %720 = vmatpush1.msra.mxu0 %v643
    %721 = vmatprep.subr.mxu0 %v646
    %722 = vmatpush1.msra.mxu0 %v645
    %723 = vmatprep.subr.mxu0 %v648
    %724 = vmatpush1.msra.mxu0 %v647
    %725 = vmatprep.subr.mxu0 %v650
    %726 = vmatpush1.msra.mxu0 %v649
    %727 = vmatprep.subr.mxu0 %v652
    %728 = vmatpush1.msra.mxu0 %v651
    %729 = vmatprep.subr.mxu0 %v654
    %730 = vmatpush1.msra.mxu0 %v653
    %731 = vmatprep.subr.mxu0 %v656
    %732 = vmatpush1.msra.mxu0 %v655
    %733 = vmatprep.subr.mxu0 %v658
    %734 = vmatpush1.msra.mxu0 %v657
    %735 = vmatprep.subr.mxu0 %v660
    %736 = vmatpush1.msra.mxu0 %v659
    %737 = vmatprep.subr.mxu0 %v662
    %738 = vmatpush1.msra.mxu0 %v661
    %739 = vmatprep.mubr.f32.mxu0 %v449
    %740 = vmatmul.mubr.f32.gmra.mrb[0].mxu0 %v448
    %v741 = vpop.f32.mrb[0].mxu0
    %v742 = vadd.f32 %v668, %v741
    %v743 = vpop.f32.mrb[0].mxu0
    %v744 = vadd.f32 %v672, %v743
    %745 = vdwg.mxu0
    %v746 = vmax.f32 %v742, 0.0
    %v747 = vmax.f32 %v744, 0.0
    %v748 = vld [vmem:[%s9] ss:$2 sm:$0x3]
    %v750 = vlaneseq
    %v751 = vshrl.u32 %v750, 7
    %v752 = vsub.s32 0, %v751
    %v753 = vrot.slane %v748, %v752
    %v754 = vlaneseq
    %v755 = vshrl.u32 %v754, 7
    %v756 = vsub.s32 1, %v755
    %v757 = vrot.slane %v748, %v756
    %v760 = vmul.f32 %v597, %v753
    %v761 = vmul.f32 %v598, %v757
    %v762 = vadd.f32 %v760, %v761
    %763 = vadd.xlane.f32.xlu0 %v762
    %v764 = vpop.xlane.xlu0 %763
    %s765 = scalar_lea.vmem %s9, 1
    %v766 = vld [vmem:[%s765] ss:$2 sm:$0x3]
    %v768 = vlaneseq
    %v769 = vshrl.u32 %v768, 7
    %v770 = vsub.s32 0, %v769
    %v771 = vrot.slane %v766, %v770
    %v772 = vlaneseq
    %v773 = vshrl.u32 %v772, 7
    %v774 = vsub.s32 1, %v773
    %v775 = vrot.slane %v766, %v774
    %v778 = vmul.f32 %v746, %v771
    %v779 = vmul.f32 %v747, %v775
    %v780 = vadd.f32 %v778, %v779
    %781 = vadd.xlane.f32.xlu0 %v780
    %v782 = vpop.xlane.xlu0 %781
    %v783 = vlaneseq
    %v784 = vand.u32 %v783, 127
    %vm785 = vcmp.eq.s32.totalorder %v784, 0
    %v786 = vsel %vm785, %v764, %v782
    %v787 = vld [vmem:[%s10] sm:$0x1]
    %v789 = vlaneseq
    %v790 = vshrl.u32 %v789, 7
    %v791 = vsub.s32 0, %v790
    %v792 = vrot.slane %v787, %v791
    %v794 = vadd.f32 %v786, %v792
    %vm795 = vcmask 15360
    %796 = vst.msk [vmem:[%s11] sm:$0xff] %vm795, %v794
    // Predicated region
    $region70: #{tpu_custom_call.1} parent=1 // pred_check
      _
    $region71: #{tpu_custom_call.1} parent=1 // pred_check_branch
      %798 = sbr.rel (0) target = $region73
    $region72: #{tpu_custom_call.1} parent=1 // pred_region
      _
    $region73: #{tpu_custom_call.1} parent=1 // pred_fallthru
      _
    // Predicated region
    $region74: #{tpu_custom_call.1} parent=1 // pred_check
      _
    $region75: #{tpu_custom_call.1} parent=1 // pred_check_branch
      %800 = sbr.rel (0) target = $region77
    $region76: #{tpu_custom_call.1} parent=1 // pred_region
      _
    $region77: #{tpu_custom_call.1} parent=1 // pred_fallthru
      _
    %801 = vsyncpa [#allocation3], 1
    %802 = vsyncpa [#allocation5], 1
    %803 = vsyncpa [#allocation8], 1
    %804 = vsyncpa [#allocation11], 1

</llo_original>
